<compile_context>
chip_gen: v7x
topology: tpu7x:2x2x1
jax: 0.10.0
libtpu: 0.0.40
codegen_flags: <defaults>
</compile_context>

<pallas_src>
import functools
import math

import jax
import jax.numpy as jnp
from jax.experimental import pallas as pl
from jax.experimental.pallas import tpu as pltpu

LANE = 128                            # vreg lane width -> pad d_out to this
VMEM_LIMIT_BYTES = 48 * 1024 * 1024   # > 32 MiB default scoped limit, < v7x 64 MiB


def _round_up(x, m):
    return (x + m - 1) // m * m


# ---------------------------------------------------------------------------
# Pass 1: fused Q/K/V projection — each token projected exactly once.
# ---------------------------------------------------------------------------
def _qkv_proj_kernel(x_ref, w_ref, q_ref, k_ref, v_ref, *, dp):
    x = x_ref[...].astype(w_ref.dtype)          # cast to the MXU input dtype
    q_ref[...] = jnp.dot(x, w_ref[:, 0 * dp:1 * dp],
                         preferred_element_type=jnp.float32).astype(q_ref.dtype)
    k_ref[...] = jnp.dot(x, w_ref[:, 1 * dp:2 * dp],
                         preferred_element_type=jnp.float32).astype(k_ref.dtype)
    v_ref[...] = jnp.dot(x, w_ref[:, 2 * dp:3 * dp],
                         preferred_element_type=jnp.float32).astype(v_ref.dtype)


# ---------------------------------------------------------------------------
# Pass 2: causal flash attention (online softmax, O(tile^2) temporaries).
# ---------------------------------------------------------------------------
def _flash_attn_kernel(q_ref, k_ref, v_ref, o_ref, m_sc, l_sc, acc_sc,
                       *, tile, dp):
    qi = pl.program_id(0)
    kj = pl.program_id(1)
    n_kv = pl.num_programs(1)

    @pl.when(kj == 0)
    def _init():
        m_sc[...] = jnp.full((tile, 1), -jnp.inf, jnp.float32)
        l_sc[...] = jnp.zeros((tile, 1), jnp.float32)
        acc_sc[...] = jnp.zeros((tile, dp), jnp.float32)

    def _update(apply_mask):
        # scores = q @ k.T without materializing k.T (contract last dims).
        s = jax.lax.dot_general(q_ref[...], k_ref[...],
                                dimension_numbers=(((1,), (1,)), ((), ())),
                                preferred_element_type=jnp.float32)
        if apply_mask:
            # Causal mask (strict upper triangle -> -inf).  Zero-padded KV
            # rows (seq % tile != 0) only ever appear in the last kv tile,
            # which is only computed on the diagonal, and their column index
            # exceeds every valid row index, so this mask also neutralizes
            # them.  Padded *query* rows are finite (no NaN) and sliced off.
            row = qi * tile + jax.lax.broadcasted_iota(jnp.int32, (tile, tile), 0)
            col = kj * tile + jax.lax.broadcasted_iota(jnp.int32, (tile, tile), 1)
            s = jnp.where(col <= row, s, -jnp.inf)
        m_prev = m_sc[...]
        m_new = jnp.maximum(m_prev, jnp.max(s, axis=-1, keepdims=True))
        alpha = jnp.exp(m_prev - m_new)
        p = jnp.exp(s - m_new)
        l_sc[...] = alpha * l_sc[...] + jnp.sum(p, axis=-1, keepdims=True)
        acc_sc[...] = alpha * acc_sc[...] + jnp.dot(
            p.astype(v_ref.dtype), v_ref[...],
            preferred_element_type=jnp.float32)
        m_sc[...] = m_new

    @pl.when(kj == qi)            # diagonal tile: causal mask required
    def _diag():
        _update(apply_mask=True)

    @pl.when(kj < qi)             # strictly below the diagonal: no mask needed
    def _below():
        _update(apply_mask=False)

    # kj > qi: causally dead -> no compute; the clamped K/V index_map also
    # suppresses the DMA for these grid steps.

    @pl.when(kj == n_kv - 1)
    def _finalize():
        # approx=True would use the otherwise-idle EUP but costs ~bf16-level
        # accuracy; keep the exact reciprocal so the f32 path stays exact.
        o_ref[...] = (acc_sc[...] * pl.reciprocal(l_sc[...], approx=False)
                      ).astype(o_ref.dtype)


def prepare_qkv_weight(w_query, w_key, w_value, *, mxu_dtype=jnp.bfloat16):
    """One-time weight prep (call OUTSIDE the inference hot loop).

    Folds 1/sqrt(d_out) into Wq, transposes each weight to [d_in, d_out],
    zero-pads d_out up to the 128-lane vreg width, and concatenates Wq|Wk|Wv
    into a single [d_in, 3*dp] slab stored in the MXU input dtype (bf16 by
    default; pass mxu_dtype=jnp.float32 for full-precision matmuls).
    """
    d_out, d_in = w_query.shape
    dp = _round_up(max(d_out, LANE), LANE)
    scale = 1.0 / math.sqrt(d_out)

    def prep(w, s=1.0):
        wt = (w.astype(jnp.float32) * s).T                 # [d_in, d_out]
        return jnp.pad(wt, ((0, 0), (0, dp - d_out)))      # [d_in, dp]

    w_qkv = jnp.concatenate([prep(w_query, scale), prep(w_key), prep(w_value)],
                            axis=1).astype(mxu_dtype)
    return w_qkv, dp


def causal_self_attention(x, w_qkv, d_out, dp, *, tile=256):
    """Causal single-head self-attention.  x: [seq, d_in]; (w_qkv, dp) from
    prepare_qkv_weight.  Returns [seq, d_out], matching the PyTorch module."""
    seq, d_in = x.shape
    assert w_qkv.shape == (d_in, 3 * dp)
    mxu_dtype = w_qkv.dtype
    out_dtype = x.dtype
    isz = jnp.dtype(mxu_dtype).itemsize

    # Square (tq == tk) tile, clamped to the sequence and rounded to the MXU
    # dtype's sublane granularity.  Default 256 fills the 256-wide MXU on
    # v6e/v7x; pass tile=128 on v5e (128-wide MXU).
    sublane = 16 if isz == 2 else 8
    tile = min(tile, _round_up(seq, sublane))
    tile = max(sublane, _round_up(tile, sublane))
    seq_p = _round_up(seq, tile)
    n = seq_p // tile

    x_p = x if seq_p == seq else jnp.pad(x, ((0, seq_p - seq), (0, 0)))

    # ---- Pass 1: Q/K/V projection (runs exactly once per token) ----
    proj_cost = pl.CostEstimate(
        flops=2 * seq_p * d_in * 3 * dp,
        transcendentals=0,
        bytes_accessed=int(x_p.size * x_p.dtype.itemsize
                           + w_qkv.size * isz + 3 * seq_p * dp * isz))
    q, k, v = pl.pallas_call(
        functools.partial(_qkv_proj_kernel, dp=dp),
        out_shape=tuple(jax.ShapeDtypeStruct((seq_p, dp), mxu_dtype)
                        for _ in range(3)),
        grid_spec=pltpu.PrefetchScalarGridSpec(
            num_scalar_prefetch=0,
            grid=(n,),
            in_specs=[
                pl.BlockSpec((tile, d_in), lambda i: (i, 0)),    # x rows
                # Constant index -> the slab is DMA'd once and stays resident.
                pl.BlockSpec((d_in, 3 * dp), lambda i: (0, 0)),  # fused W_qkv
            ],
            out_specs=[pl.BlockSpec((tile, dp), lambda i: (i, 0))] * 3),
        compiler_params=pltpu.CompilerParams(
            dimension_semantics=("parallel",),
            vmem_limit_bytes=VMEM_LIMIT_BYTES),
        cost_estimate=proj_cost,
    )(x_p, w_qkv)

    # ---- Pass 2: causal flash attention over the (q_tile, kv_tile) grid ----
    n_live = n * (n + 1) // 2                 # causally-live kv tiles
    pairs = n_live * tile * tile
    attn_cost = pl.CostEstimate(
        flops=4 * dp * pairs,                 # q@k.T and p@v on live tiles only
        transcendentals=pairs,                # exp
        bytes_accessed=int(seq_p * dp * isz                    # Q
                           + 2 * n_live * tile * dp * isz      # streamed K, V
                           + seq_p * dp * jnp.dtype(out_dtype).itemsize))
    out_p = pl.pallas_call(
        functools.partial(_flash_attn_kernel, tile=tile, dp=dp),
        out_shape=jax.ShapeDtypeStruct((seq_p, dp), out_dtype),
        grid_spec=pltpu.PrefetchScalarGridSpec(
            num_scalar_prefetch=0,
            grid=(n, n),
            in_specs=[
                pl.BlockSpec((tile, dp), lambda i, j: (i, 0)),                  # Q
                # Clamped index: causally skipped kv tiles keep the resident
                # block, so Pallas issues no DMA for them (~halves K/V traffic).
                pl.BlockSpec((tile, dp), lambda i, j: (jnp.minimum(j, i), 0)),  # K
                pl.BlockSpec((tile, dp), lambda i, j: (jnp.minimum(j, i), 0)),  # V
            ],
            out_specs=pl.BlockSpec((tile, dp), lambda i, j: (i, 0)),
            scratch_shapes=[
                pltpu.VMEM((tile, 1), jnp.float32),    # running row max
                pltpu.VMEM((tile, 1), jnp.float32),    # running row sum
                pltpu.VMEM((tile, dp), jnp.float32),   # output accumulator
            ]),
        compiler_params=pltpu.CompilerParams(
            dimension_semantics=("parallel", "arbitrary"),   # q axis -> megacore
            vmem_limit_bytes=VMEM_LIMIT_BYTES),
        cost_estimate=attn_cost,
    )(q, k, v)

    # A consumer that accepts the lane-padded (seq_p, dp) slab can skip this
    # final slice (it is one extra HBM pass); the module contract is [seq, d_out].
    return out_p[:seq, :d_out]


def _reference(x, w_query, w_key, w_value):
    """Pure-JAX port of the PyTorch module (f32, highest matmul precision)."""
    hp = jax.lax.Precision.HIGHEST
    q = jnp.dot(x, w_query.T, precision=hp)
    k = jnp.dot(x, w_key.T, precision=hp)
    v = jnp.dot(x, w_value.T, precision=hp)
    scores = jnp.dot(q, k.T, precision=hp)
    seq = scores.shape[0]
    mask = jnp.triu(jnp.ones((seq, seq), dtype=bool), k=1)
    masked = jnp.where(mask, -jnp.inf, scores)
    attn = jax.nn.softmax(masked / jnp.sqrt(jnp.float32(k.shape[-1])), axis=-1)
    return jnp.dot(attn, v, precision=hp)


if __name__ == "__main__":
    def make_case(key, seq, d_in, d_out):
        kx, kq, kk, kv = jax.random.split(key, 4)
        bound = 1.0 / math.sqrt(d_in)     # nn.Linear default init range
        x = jax.random.normal(kx, (seq, d_in), jnp.float32)
        wq = jax.random.uniform(kq, (d_out, d_in), jnp.float32, -bound, bound)
        wk = jax.random.uniform(kk, (d_out, d_in), jnp.float32, -bound, bound)
        wv = jax.random.uniform(kv, (d_out, d_in), jnp.float32, -bound, bound)
        return x, wq, wk, wv

    def check(out, ref, name):
        assert out.shape == ref.shape, f"{name}: shape {out.shape} vs {ref.shape}"
        # Tolerance sized for the bf16 MXU-input path (accumulation is f32);
        # the f32 path is far tighter in practice but shares the same check.
        assert jnp.allclose(out, ref, atol=2e-2, rtol=2e-2), f"{name}: mismatch"

    k1, k2 = jax.random.split(jax.random.PRNGKey(0))

    # Case 1: small module-sized shapes (single-tile grid).
    seq, d_in, d_out = 8, 32, 16
    x, wq, wk, wv = make_case(k1, seq, d_in, d_out)
    ref = _reference(x, wq, wk, wv)
    for dt, name in ((jnp.bfloat16, "small/bf16"), (jnp.float32, "small/f32")):
        w_qkv, dp = prepare_qkv_weight(wq, wk, wv, mxu_dtype=dt)
        out = jax.block_until_ready(causal_self_attention(x, w_qkv, d_out, dp))
        check(out, ref, name)

    # Case 2: multi-tile grid with seq NOT a multiple of the tile — exercises
    # the causal tile skip, the clamped K/V DMA and the sequence padding path.
    seq, d_in, d_out = 200, 96, 40
    x, wq, wk, wv = make_case(k2, seq, d_in, d_out)
    ref = _reference(x, wq, wk, wv)
    for dt, name in ((jnp.bfloat16, "tiled/bf16"), (jnp.float32, "tiled/f32")):
        w_qkv, dp = prepare_qkv_weight(wq, wk, wv, mxu_dtype=dt)
        out = jax.block_until_ready(
            causal_self_attention(x, w_qkv, d_out, dp, tile=64))
        check(out, ref, name)

    print("KERNEL_OK")
</pallas_src>

<mosaic_0001>
module attributes {stable_mosaic.version = 11 : i64} {
  func.func @_qkv_proj_kernel(%arg0: i32, %arg1: memref<16x32xf32, #tpu.memory_space<vmem>>, %arg2: memref<32x384xbf16, #tpu.memory_space<vmem>>, %arg3: memref<16x128xbf16, #tpu.memory_space<vmem>>, %arg4: memref<16x128xbf16, #tpu.memory_space<vmem>>, %arg5: memref<16x128xbf16, #tpu.memory_space<vmem>>) attributes {dimension_semantics = [#tpu.dimension_semantics<parallel>], iteration_bounds = array<i64: 1>, scalar_prefetch = 0 : i64, scratch_operands = 0 : i64, tpu.core_type = #tpu.core_type<tc>, window_params = [{transform_indices = @transform_0, window_bounds = array<i64: 16, 32>}, {pipeline_mode = #tpu.pipeline_mode<synchronous>, transform_indices = @transform_1, window_bounds = array<i64: 32, 384>}, {transform_indices = @transform_2, window_bounds = array<i64: 16, 128>}, {transform_indices = @transform_3, window_bounds = array<i64: 16, 128>}, {transform_indices = @transform_4, window_bounds = array<i64: 16, 128>}]} {
    %c0 = arith.constant 0 : index
    %c0_0 = arith.constant 0 : index
    %0 = vector.load %arg1[%c0, %c0_0] : memref<16x32xf32, #tpu.memory_space<vmem>>, vector<16x32xf32>
    %1 = arith.truncf %0 : vector<16x32xf32> to vector<16x32xbf16>
    %c0_1 = arith.constant 0 : index
    %c0_2 = arith.constant 0 : index
    %2 = vector.load %arg2[%c0_1, %c0_2] : memref<32x384xbf16, #tpu.memory_space<vmem>>, vector<32x128xbf16>
    %cst = arith.constant dense<0.000000e+00> : vector<16x128xf32>
    %3 = tpu.matmul %1, %2, %cst {dimension_numbers = #tpu.dot_dimension_numbers<[1], [0], [0], [1], [0, 0, 1, 1], [], []>} : vector<16x32xbf16>, vector<32x128xbf16>, vector<16x128xf32> -> vector<16x128xf32>
    %4 = arith.truncf %3 : vector<16x128xf32> to vector<16x128xbf16>
    %c0_3 = arith.constant 0 : index
    %c0_4 = arith.constant 0 : index
    %5 = vector.load %arg3[%c0_3, %c0_4] : memref<16x128xbf16, #tpu.memory_space<vmem>>, vector<16x128xbf16>
    tpu.vector_store %arg3[%c0_3, %c0_4], %4 {strides = array<i32>} : memref<16x128xbf16, #tpu.memory_space<vmem>>, vector<16x128xbf16>,
    %c0_5 = arith.constant 0 : index
    %c128 = arith.constant 128 : index
    %6 = vector.load %arg2[%c0_5, %c128] : memref<32x384xbf16, #tpu.memory_space<vmem>>, vector<32x128xbf16>
    %cst_6 = arith.constant dense<0.000000e+00> : vector<16x128xf32>
    %7 = tpu.matmul %1, %6, %cst_6 {dimension_numbers = #tpu.dot_dimension_numbers<[1], [0], [0], [1], [0, 0, 1, 1], [], []>} : vector<16x32xbf16>, vector<32x128xbf16>, vector<16x128xf32> -> vector<16x128xf32>
    %8 = arith.truncf %7 : vector<16x128xf32> to vector<16x128xbf16>
    %c0_7 = arith.constant 0 : index
    %c0_8 = arith.constant 0 : index
    %9 = vector.load %arg4[%c0_7, %c0_8] : memref<16x128xbf16, #tpu.memory_space<vmem>>, vector<16x128xbf16>
    tpu.vector_store %arg4[%c0_7, %c0_8], %8 {strides = array<i32>} : memref<16x128xbf16, #tpu.memory_space<vmem>>, vector<16x128xbf16>,
    %c0_9 = arith.constant 0 : index
    %c256 = arith.constant 256 : index
    %10 = vector.load %arg2[%c0_9, %c256] : memref<32x384xbf16, #tpu.memory_space<vmem>>, vector<32x128xbf16>
    %cst_10 = arith.constant dense<0.000000e+00> : vector<16x128xf32>
    %11 = tpu.matmul %1, %10, %cst_10 {dimension_numbers = #tpu.dot_dimension_numbers<[1], [0], [0], [1], [0, 0, 1, 1], [], []>} : vector<16x32xbf16>, vector<32x128xbf16>, vector<16x128xf32> -> vector<16x128xf32>
    %12 = arith.truncf %11 : vector<16x128xf32> to vector<16x128xbf16>
    %c0_11 = arith.constant 0 : index
    %c0_12 = arith.constant 0 : index
    %13 = vector.load %arg5[%c0_11, %c0_12] : memref<16x128xbf16, #tpu.memory_space<vmem>>, vector<16x128xbf16>
    tpu.vector_store %arg5[%c0_11, %c0_12], %12 {strides = array<i32>} : memref<16x128xbf16, #tpu.memory_space<vmem>>, vector<16x128xbf16>,
    return
  }
  func.func @transform_0(%arg0: i32) -> (i32, i32) {
    %c0_i32 = arith.constant 0 : i32
    %c0_i32_0 = arith.constant 0 : i32
    return %arg0, %c0_i32 : i32, i32
  }
  func.func @transform_1(%arg0: i32) -> (i32, i32) {
    %c0_i32 = arith.constant 0 : i32
    %c0_i32_0 = arith.constant 0 : i32
    %c0_i32_1 = arith.constant 0 : i32
    return %c0_i32, %c0_i32_0 : i32, i32
  }
  func.func @transform_2(%arg0: i32) -> (i32, i32) {
    %c0_i32 = arith.constant 0 : i32
    %c0_i32_0 = arith.constant 0 : i32
    return %arg0, %c0_i32 : i32, i32
  }
  func.func @transform_3(%arg0: i32) -> (i32, i32) {
    %c0_i32 = arith.constant 0 : i32
    %c0_i32_0 = arith.constant 0 : i32
    return %arg0, %c0_i32 : i32, i32
  }
  func.func @transform_4(%arg0: i32) -> (i32, i32) {
    %c0_i32 = arith.constant 0 : i32
    %c0_i32_0 = arith.constant 0 : i32
    return %arg0, %c0_i32 : i32, i32
  }
}

</mosaic_0001>

<llo_original>
// kernel: tpu_custom_call.1
$region0: #{tpu_custom_call.1}
  #allocation0 [shape = 'u32[]', space=smem, size = 0x4, offset = 0x4, fixed_abs, tag = 'smem constant byte address 0x4 - core index']
  #allocation1 [shape = 'u32[144,128]{1,0:T(1,128)}', space=vmem, size = 0x12000, scoped, tag = 'internal scratch']
  %s0 = inlined_call_operand.hbm [shape: f32[16,32], index: 0, kind: input, shape index: {}]
  %s1 = inlined_call_operand.hbm [shape: bf16[32,384], index: 1, kind: input, shape index: {}]
  %s2 = inlined_call_operand.hbm [shape: bf16[16,128], index: 2, kind: output, shape index: {0}]
  %s3 = inlined_call_operand.hbm [shape: bf16[16,128], index: 3, kind: output, shape index: {1}]
  %s4 = inlined_call_operand.hbm [shape: bf16[16,128], index: 4, kind: output, shape index: {2}]
  %5 = xla_tuple %s2, %s3, %s4
  %s6 = sld [smem:[#allocation0]]
  $region42: #{tpu_custom_call.1} parent=0
    _
  %s8 = ssub.s32 1, %s6
  %s9 = scalar_select 0, %s8, %s6
  $region1: #{tpu_custom_call.1} parent=0
    #allocation2 [shape = 'u8[8192]{0}', space=vmem, size = 0x2000, scoped, tag = 'input window, operand 0, single buffered']
    #allocation3 [shape = 's32[1]{0}', space=sflag, size = 0x4, scoped, tag = 'scoped memory for tpu_custom_call.1']
    #allocation4 [shape = 's32[1]{0}', space=sflag, size = 0x4, scoped, tag = 'scoped memory for tpu_custom_call.1']
    #allocation5 [shape = 'u8[24576]{0}', space=vmem, size = 0x6000, scoped, tag = 'input window, operand 1, single buffered']
    #allocation6 [shape = 's32[1]{0}', space=sflag, size = 0x4, scoped, tag = 'scoped memory for tpu_custom_call.1']
    #allocation7 [shape = 'u8[4096]{0}', space=vmem, size = 0x1000, scoped, tag = 'output window, operand 0, single buffered']
    #allocation8 [shape = 'u8[4096]{0}', space=vmem, size = 0x1000, scoped, tag = 'output window, operand 1, single buffered']
    #allocation9 [shape = 's32[1]{0}', space=sflag, size = 0x4, scoped, tag = 'scoped memory for tpu_custom_call.1']
    #allocation10 [shape = 'u8[4096]{0}', space=vmem, size = 0x1000, scoped, tag = 'output window, operand 2, single buffered']
    %10 = vsyncpa [#allocation3], 0
    %11 = vsyncpa [#allocation6], 0
    %12 = vsyncpa [#allocation4], 0
    %13 = vsyncpa [#allocation9], 0
    // Predicated region
    $region2: #{tpu_custom_call.1} parent=1 // pred_check
      _
    $region3: #{tpu_custom_call.1} parent=1 // pred_check_branch
      %15 = sbr.rel (0) target = $region5
    $region4: #{tpu_custom_call.1} parent=1 // pred_region
      %s17 = ssub.s32 256, 256
      %18 = vsyncadd [#allocation3], %s17
      %s19 = sshll.u32 [#allocation2], 4
      %s20 = int_to_ptr.vmem [resolvable:$true] %s19
      %25 = dma.hbm_to_vmem [thread:$0]  %s0, 256, %s20, [#allocation3], 128, 128, 8
    $region5: #{tpu_custom_call.1} parent=1 // pred_fallthru
      _
    // Predicated region
    $region6: #{tpu_custom_call.1} parent=1 // pred_check
      _
    $region7: #{tpu_custom_call.1} parent=1 // pred_check_branch
      %27 = sbr.rel (0) target = $region9
    $region8: #{tpu_custom_call.1} parent=1 // pred_region
      %s29 = ssub.s32 768, 768
      %30 = vsyncadd [#allocation6], %s29
      %s31 = sshll.u32 [#allocation5], 4
      %s32 = int_to_ptr.vmem [resolvable:$true] %s31
      %37 = dma.hbm_to_vmem [thread:$0]  %s1, 768, %s32, [#allocation6], 192, 192, 12
    $region9: #{tpu_custom_call.1} parent=1 // pred_fallthru
      _
    // Predicated region
    $region10: #{tpu_custom_call.1} parent=1 // pred_check
      _
    $region11: #{tpu_custom_call.1} parent=1 // pred_check_branch
      %39 = sbr.rel (0) target = $region13
    $region12: #{tpu_custom_call.1} parent=1 // pred_region
      %40 = dma.done [#allocation3], 256
    $region13: #{tpu_custom_call.1} parent=1 // pred_fallthru
      _
    // Predicated region
    $region14: #{tpu_custom_call.1} parent=1 // pred_check
      _
    $region15: #{tpu_custom_call.1} parent=1 // pred_check_branch
      %42 = sbr.rel (0) target = $region17
    $region16: #{tpu_custom_call.1} parent=1 // pred_region
      %43 = dma.done [#allocation6], 768
    $region17: #{tpu_custom_call.1} parent=1 // pred_fallthru
      _
    %v45 = vld [vmem:[#allocation2] sm:$0xff]
    %v46 = vld [vmem:[#allocation2 + $0x8] sm:$0xff]
    %v47 = vpack.c.bf16 %v46, %v45
    %v48 = vld [vmem:[#allocation5] sm:$0xf]
    %v49 = vld [vmem:[#allocation5 + $0xc] sm:$0xf]
    %v50 = vld [vmem:[#allocation5 + $0x18] sm:$0xf]
    %v51 = vld [vmem:[#allocation5 + $0x24] sm:$0xf]
    %v56 = vunpack.c.l.b16 %v48
    %v57 = vunpack.c.l.b16 %v49
    %v58 = vunpack.c.l.b16 %v50
    %v59 = vunpack.c.l.b16 %v51
    %v60 = vpack.c.b16 %v57, %v56
    %v61 = vpack.c.b16 %v59, %v58
    %vm64 = vcmask 261120
    %v66 = vsel %vm64, %v47, 0
    %68 = vmatprep.subr.bf16.mxu0 0
    %69 = vmatpush1.bf16.msra.mxu0 %v60
    %70 = vmatprep.subr.bf16.mxu0 0
    %71 = vmatpush1.bf16.msra.mxu0 %v61
    %72 = vmatprep.subr.bf16.mxu0 0
    %73 = vmatpush1.bf16.msra.mxu0 0
    %74 = vmatprep.subr.bf16.mxu0 0
    %75 = vmatpush1.bf16.msra.mxu0 0
    %76 = vmatprep.subr.bf16.mxu0 0
    %77 = vmatpush1.bf16.msra.mxu0 0
    %78 = vmatprep.subr.bf16.mxu0 0
    %79 = vmatpush1.bf16.msra.mxu0 0
    %80 = vmatprep.subr.bf16.mxu0 0
    %81 = vmatpush1.bf16.msra.mxu0 0
    %82 = vmatprep.subr.bf16.mxu0 0
    %83 = vmatpush1.bf16.msra.mxu0 0
    %84 = vmatprep.subr.bf16.mxu0 0
    %85 = vmatpush1.bf16.msra.mxu0 0
    %86 = vmatprep.subr.bf16.mxu0 0
    %87 = vmatpush1.bf16.msra.mxu0 0
    %88 = vmatprep.subr.bf16.mxu0 0
    %89 = vmatpush1.bf16.msra.mxu0 0
    %90 = vmatprep.subr.bf16.mxu0 0
    %91 = vmatpush1.bf16.msra.mxu0 0
    %92 = vmatprep.subr.bf16.mxu0 0
    %93 = vmatpush1.bf16.msra.mxu0 0
    %94 = vmatprep.subr.bf16.mxu0 0
    %95 = vmatpush1.bf16.msra.mxu0 0
    %96 = vmatprep.subr.bf16.mxu0 0
    %97 = vmatpush1.bf16.msra.mxu0 0
    %98 = vmatprep.subr.bf16.mxu0 0
    %99 = vmatpush1.bf16.msra.mxu0 0
    %100 = vmatprep.mubr.bf16.mxu0 0
    %101 = vmatmul.mubr.bf16.gmra.mrb[0].mxu0 %v66
    %v102 = vpop.f32.mrb[0].mxu0
    %v103 = vadd.f32 0.0, %v102
    %v104 = vpop.f32.mrb[0].mxu0
    %v105 = vpop.f32.mrb[0].mxu0
    %v106 = vadd.f32 0.0, %v105
    %v107 = vpop.f32.mrb[0].mxu0
    %108 = vdwg.mxu0
    %v109 = vpack.c.bf16 %v106, %v103
    %v111 = vunpack.c.l.b16 %v109
    %v112 = vunpack.c.h.b16 %v109
    %v113 = vpack.c.b16 %v111, %v111
    %v114 = vpack.c.b16 %v112, %v112
    %117 = vst [vmem:[#allocation7] sm:$0xf] %v113
    %118 = vst [vmem:[#allocation7 + $0x4] sm:$0xf] %v114
    %v119 = vld [vmem:[#allocation5 + $0x4] sm:$0xf]
    %v120 = vld [vmem:[#allocation5 + $0x10] sm:$0xf]
    %v121 = vld [vmem:[#allocation5 + $0x1c] sm:$0xf]
    %v122 = vld [vmem:[#allocation5 + $0x28] sm:$0xf]
    %v127 = vunpack.c.l.b16 %v119
    %v128 = vunpack.c.l.b16 %v120
    %v129 = vunpack.c.l.b16 %v121
    %v130 = vunpack.c.l.b16 %v122
    %v131 = vpack.c.b16 %v128, %v127
    %v132 = vpack.c.b16 %v130, %v129
    %135 = vmatprep.subr.bf16.mxu0 0
    %136 = vmatpush1.bf16.msra.mxu0 %v131
    %137 = vmatprep.subr.bf16.mxu0 0
    %138 = vmatpush1.bf16.msra.mxu0 %v132
    %139 = vmatprep.subr.bf16.mxu0 0
    %140 = vmatpush1.bf16.msra.mxu0 0
    %141 = vmatprep.subr.bf16.mxu0 0
    %142 = vmatpush1.bf16.msra.mxu0 0
    %143 = vmatprep.subr.bf16.mxu0 0
    %144 = vmatpush1.bf16.msra.mxu0 0
    %145 = vmatprep.subr.bf16.mxu0 0
    %146 = vmatpush1.bf16.msra.mxu0 0
    %147 = vmatprep.subr.bf16.mxu0 0
    %148 = vmatpush1.bf16.msra.mxu0 0
    %149 = vmatprep.subr.bf16.mxu0 0
    %150 = vmatpush1.bf16.msra.mxu0 0
    %151 = vmatprep.subr.bf16.mxu0 0
    %152 = vmatpush1.bf16.msra.mxu0 0
    %153 = vmatprep.subr.bf16.mxu0 0
    %154 = vmatpush1.bf16.msra.mxu0 0
    %155 = vmatprep.subr.bf16.mxu0 0
    %156 = vmatpush1.bf16.msra.mxu0 0
    %157 = vmatprep.subr.bf16.mxu0 0
    %158 = vmatpush1.bf16.msra.mxu0 0
    %159 = vmatprep.subr.bf16.mxu0 0
    %160 = vmatpush1.bf16.msra.mxu0 0
    %161 = vmatprep.subr.bf16.mxu0 0
    %162 = vmatpush1.bf16.msra.mxu0 0
    %163 = vmatprep.subr.bf16.mxu0 0
    %164 = vmatpush1.bf16.msra.mxu0 0
    %165 = vmatprep.subr.bf16.mxu0 0
    %166 = vmatpush1.bf16.msra.mxu0 0
    %167 = vmatprep.mubr.bf16.mxu0 0
    %168 = vmatmul.mubr.bf16.gmra.mrb[0].mxu0 %v66
    %v169 = vpop.f32.mrb[0].mxu0
    %v170 = vadd.f32 0.0, %v169
    %v171 = vpop.f32.mrb[0].mxu0
    %v172 = vpop.f32.mrb[0].mxu0
    %v173 = vadd.f32 0.0, %v172
    %v174 = vpop.f32.mrb[0].mxu0
    %175 = vdwg.mxu0
    %v176 = vpack.c.bf16 %v173, %v170
    %v178 = vunpack.c.l.b16 %v176
    %v179 = vunpack.c.h.b16 %v176
    %v180 = vpack.c.b16 %v178, %v178
    %v181 = vpack.c.b16 %v179, %v179
    %184 = vst [vmem:[#allocation8] sm:$0xf] %v180
    %185 = vst [vmem:[#allocation8 + $0x4] sm:$0xf] %v181
    %v186 = vld [vmem:[#allocation5 + $0x8] sm:$0xf]
    %v187 = vld [vmem:[#allocation5 + $0x14] sm:$0xf]
    %v188 = vld [vmem:[#allocation5 + $0x20] sm:$0xf]
    %v189 = vld [vmem:[#allocation5 + $0x2c] sm:$0xf]
    %v194 = vunpack.c.l.b16 %v186
    %v195 = vunpack.c.l.b16 %v187
    %v196 = vunpack.c.l.b16 %v188
    %v197 = vunpack.c.l.b16 %v189
    %v198 = vpack.c.b16 %v195, %v194
    %v199 = vpack.c.b16 %v197, %v196
    %202 = vmatprep.subr.bf16.mxu0 0
    %203 = vmatpush1.bf16.msra.mxu0 %v198
    %204 = vmatprep.subr.bf16.mxu0 0
    %205 = vmatpush1.bf16.msra.mxu0 %v199
    %206 = vmatprep.subr.bf16.mxu0 0
    %207 = vmatpush1.bf16.msra.mxu0 0
    %208 = vmatprep.subr.bf16.mxu0 0
    %209 = vmatpush1.bf16.msra.mxu0 0
    %210 = vmatprep.subr.bf16.mxu0 0
    %211 = vmatpush1.bf16.msra.mxu0 0
    %212 = vmatprep.subr.bf16.mxu0 0
    %213 = vmatpush1.bf16.msra.mxu0 0
    %214 = vmatprep.subr.bf16.mxu0 0
    %215 = vmatpush1.bf16.msra.mxu0 0
    %216 = vmatprep.subr.bf16.mxu0 0
    %217 = vmatpush1.bf16.msra.mxu0 0
    %218 = vmatprep.subr.bf16.mxu0 0
    %219 = vmatpush1.bf16.msra.mxu0 0
    %220 = vmatprep.subr.bf16.mxu0 0
    %221 = vmatpush1.bf16.msra.mxu0 0
    %222 = vmatprep.subr.bf16.mxu0 0
    %223 = vmatpush1.bf16.msra.mxu0 0
    %224 = vmatprep.subr.bf16.mxu0 0
    %225 = vmatpush1.bf16.msra.mxu0 0
    %226 = vmatprep.subr.bf16.mxu0 0
    %227 = vmatpush1.bf16.msra.mxu0 0
    %228 = vmatprep.subr.bf16.mxu0 0
    %229 = vmatpush1.bf16.msra.mxu0 0
    %230 = vmatprep.subr.bf16.mxu0 0
    %231 = vmatpush1.bf16.msra.mxu0 0
    %232 = vmatprep.subr.bf16.mxu0 0
    %233 = vmatpush1.bf16.msra.mxu0 0
    %234 = vmatprep.mubr.bf16.mxu0 0
    %235 = vmatmul.mubr.bf16.gmra.mrb[0].mxu0 %v66
    %v236 = vpop.f32.mrb[0].mxu0
    %v237 = vadd.f32 0.0, %v236
    %v238 = vpop.f32.mrb[0].mxu0
    %v239 = vpop.f32.mrb[0].mxu0
    %v240 = vadd.f32 0.0, %v239
    %v241 = vpop.f32.mrb[0].mxu0
    %242 = vdwg.mxu0
    %v243 = vpack.c.bf16 %v240, %v237
    %v245 = vunpack.c.l.b16 %v243
    %v246 = vunpack.c.h.b16 %v243
    %v247 = vpack.c.b16 %v245, %v245
    %v248 = vpack.c.b16 %v246, %v246
    %251 = vst [vmem:[#allocation10] sm:$0xf] %v247
    %252 = vst [vmem:[#allocation10 + $0x4] sm:$0xf] %v248
    // Predicated region
    $region18: #{tpu_custom_call.1} parent=1 // pred_check
      _
    $region19: #{tpu_custom_call.1} parent=1 // pred_check_branch
      %254 = sbr.rel (0) target = $region21
    $region20: #{tpu_custom_call.1} parent=1 // pred_region
      %s256 = ssub.s32 128, 128
      %257 = vsyncadd [#allocation4], %s256
      %s258 = sshll.u32 [#allocation7], 4
      %s259 = int_to_ptr.vmem [resolvable:$true] %s258
      %264 = dma.vmem_to_hbm [thread:$0]  %s259, 128, %s2, [#allocation4], 64, 64, 4
    $region21: #{tpu_custom_call.1} parent=1 // pred_fallthru
      _
    // Predicated region
    $region22: #{tpu_custom_call.1} parent=1 // pred_check
      _
    $region23: #{tpu_custom_call.1} parent=1 // pred_check_branch
      %266 = sbr.rel (0) target = $region25
    $region24: #{tpu_custom_call.1} parent=1 // pred_region
      %s268 = ssub.s32 128, 128
      %269 = vsyncadd [#allocation9], %s268
      %s270 = sshll.u32 [#allocation8], 4
      %s271 = int_to_ptr.vmem [resolvable:$true] %s270
      %276 = dma.vmem_to_hbm [thread:$0]  %s271, 128, %s3, [#allocation9], 64, 64, 4
    $region25: #{tpu_custom_call.1} parent=1 // pred_fallthru
      _
    // Predicated region
    $region26: #{tpu_custom_call.1} parent=1 // pred_check
      _
    $region27: #{tpu_custom_call.1} parent=1 // pred_check_branch
      %278 = sbr.rel (0) target = $region29
    $region28: #{tpu_custom_call.1} parent=1 // pred_region
      %s280 = ssub.s32 128, 128
      %281 = vsyncadd [#allocation9], %s280
      %s282 = sshll.u32 [#allocation10], 4
      %s283 = int_to_ptr.vmem [resolvable:$true] %s282
      %288 = dma.vmem_to_hbm [thread:$0]  %s283, 128, %s4, [#allocation9], 64, 64, 4
    $region29: #{tpu_custom_call.1} parent=1 // pred_fallthru
      _
    // Predicated region
    $region30: #{tpu_custom_call.1} parent=1 // pred_check
      _
    $region31: #{tpu_custom_call.1} parent=1 // pred_check_branch
      %290 = sbr.rel (0) target = $region33
    $region32: #{tpu_custom_call.1} parent=1 // pred_region
      %291 = dma.done [#allocation4], 128
    $region33: #{tpu_custom_call.1} parent=1 // pred_fallthru
      _
    // Predicated region
    $region34: #{tpu_custom_call.1} parent=1 // pred_check
      _
    $region35: #{tpu_custom_call.1} parent=1 // pred_check_branch
      %293 = sbr.rel (0) target = $region37
    $region36: #{tpu_custom_call.1} parent=1 // pred_region
      %294 = dma.done [#allocation9], 128
    $region37: #{tpu_custom_call.1} parent=1 // pred_fallthru
      _
    // Predicated region
    $region38: #{tpu_custom_call.1} parent=1 // pred_check
      _
    $region39: #{tpu_custom_call.1} parent=1 // pred_check_branch
      %296 = sbr.rel (0) target = $region41
    $region40: #{tpu_custom_call.1} parent=1 // pred_region
      %297 = dma.done [#allocation9], 128
    $region41: #{tpu_custom_call.1} parent=1 // pred_fallthru
      _
    %298 = vsyncpa [#allocation3], 1
    %299 = vsyncpa [#allocation6], 1
    %300 = vsyncpa [#allocation4], 1
    %301 = vsyncpa [#allocation9], 1

</llo_original>
